<compile_context>
chip_gen: v7x
topology: tpu7x:2x2x1
jax: 0.10.0
libtpu: 0.0.40
codegen_flags: <defaults>
</compile_context>

<pallas_src>
import functools

import jax
import jax.numpy as jnp
from jax.experimental import pallas as pl
from jax.experimental.pallas import tpu as pltpu


# ----------------------------- Pallas kernel ------------------------------ #
def _fused_linear_kernel(x_ref, w_ref, b_ref, o_ref):
    """o = x @ W' + b', accumulating directly into the resident output tile.

    x_ref : (Np, TD)     flattened standard-image tile (preprocessing folded
                         into W'/b', so this is the raw [0,1] image data)
    w_ref : (TD, NCLS)   weight tile (affine preprocessing folded into rows)
    b_ref : (1, NCLS)    bias (affine offset folded in)
    o_ref : (Np, NCLS)   f32 logits; BlockSpec is constant across the D grid
                         axis, so this tile is resident and acts as the
                         accumulator.
    """
    k = pl.program_id(0)

    @pl.when(k == 0)
    def _():
        o_ref[...] = jnp.broadcast_to(b_ref[...], o_ref.shape)

    o_ref[...] += jnp.dot(x_ref[...], w_ref[...],
                          preferred_element_type=jnp.float32)  # MXU


# ------------------------------ JAX wrapper -------------------------------- #
def _round_up(v, m):
    return ((v + m - 1) // m) * m


@functools.partial(jax.jit, static_argnames=("input_space", "tile_d"))
def standard_forward(x_nchw, mean, std, input_range, w, b,
                     *, input_space="RGB", tile_d=None):
    """Forward pass of `Standard` with a synthetic linear backbone.

    x_nchw: (N, C, H, W) in [0, 1], RGB, un-normalized (the 'standard image').
    mean, std: (C,) per-channel normalization constants (RGB order).
    input_range: (2,) array, e.g. [0., 1.] or [0., 255.].
    w: (C*H*W, NCLS), b: (NCLS,)   synthetic backbone linear head.
    """
    n, ch, h, wd = x_nchw.shape
    d = ch * h * wd
    ncls = w.shape[1]

    # --- fold channel-order adaptation into W (x is never touched) -------- #
    w_perm = w.astype(jnp.float32)
    if input_space == "BGR":
        # Permuting W's rows once is equivalent to reversing x's channels
        # every call (x changes per attack query, W does not).
        w_perm = w_perm.reshape(ch, h * wd, ncls)[::-1].reshape(d, ncls)

    # --- fold range rescale + mean/std normalization into W and b --------- #
    #   logits = ((x*(hi-lo)+lo) - mean)/std @ W + b
    #          = x @ (diag(a) W)  +  (c @ W + b),
    #   with a_c = (hi-lo)/std, c_c = (lo-mean)/std, broadcast per channel.
    r_lo, r_hi = input_range[0], input_range[1]
    a_c = (r_hi - r_lo) / std                                   # (C,)
    c_c = (r_lo - mean) / std                                   # (C,)
    a_full = jnp.repeat(a_c, h * wd).astype(jnp.float32)        # (D,)
    c_full = jnp.repeat(c_c, h * wd).astype(jnp.float32)        # (D,)
    w_eff = a_full[:, None] * w_perm                            # (D, NCLS)
    b_eff = (b.astype(jnp.float32) + c_full @ w_perm).reshape(1, ncls)

    x_flat = x_nchw.reshape(n, d).astype(jnp.float32)

    # --- tiling: single step if the working set fits VMEM easily ---------- #
    if tile_d is None:
        # x (8 sublane-padded rows) + W in f32, well under the v7x 32 MiB
        # scoped default -> no reduction grid at all.
        if 4 * (d * ncls + 8 * d) <= 8 * 1024 * 1024:
            tile_d = d
        else:
            tile_d = 2048
    tile_d = min(tile_d, d)

    # Sublane-pad the batch; zero-pad D so a ragged tail is never dropped.
    n_pad = _round_up(max(n, 8), 8)
    d_pad = _round_up(d, tile_d)
    if n_pad != n or d_pad != d:
        x_flat = jnp.pad(x_flat, ((0, n_pad - n), (0, d_pad - d)))
    if d_pad != d:
        w_eff = jnp.pad(w_eff, ((0, d_pad - d), (0, 0)))

    nk = d_pad // tile_d

    out = pl.pallas_call(
        _fused_linear_kernel,
        out_shape=jax.ShapeDtypeStruct((n_pad, ncls), jnp.float32),
        grid_spec=pltpu.PrefetchScalarGridSpec(
            num_scalar_prefetch=0,
            grid=(nk,),
            in_specs=[
                pl.BlockSpec((n_pad, tile_d), lambda k: (0, k)),   # x
                pl.BlockSpec((tile_d, ncls), lambda k: (k, 0)),    # W'
                pl.BlockSpec((1, ncls), lambda k: (0, 0)),         # b'
            ],
            out_specs=pl.BlockSpec((n_pad, ncls), lambda k: (0, 0)),
        ),
        compiler_params=pltpu.CompilerParams(
            dimension_semantics=("arbitrary",),   # reduction over D
        ),
    )(x_flat, w_eff, b_eff)

    return out[:n]


# --------------------------- pure-JAX reference ---------------------------- #
def standard_forward_ref(x_nchw, mean, std, input_range, w, b, *, input_space="RGB"):
    if input_space == "BGR":
        x_nchw = x_nchw[:, ::-1, :, :]
        mean = mean[::-1]
        std = std[::-1]
    r_lo, r_hi = input_range[0], input_range[1]
    x = x_nchw * (r_hi - r_lo) + r_lo
    x = (x - mean[None, :, None, None]) / std[None, :, None, None]
    n = x.shape[0]
    return x.reshape(n, -1).astype(jnp.float32) @ w + b[None, :]


# ---------------------------------- main ----------------------------------- #
if __name__ == "__main__":
    key = jax.random.PRNGKey(0)
    k_x, k_w, k_b = jax.random.split(key, 3)

    # Synthetic victim-net configuration (mirrors net.input_space /
    # net.input_range / net.input_size of the wrapped backbone).
    input_size = (3, 16, 16)                  # C, H, W
    input_range = jnp.array([0.0, 1.0], dtype=jnp.float32)
    mean = jnp.array([0.485, 0.456, 0.406], dtype=jnp.float32)
    std = jnp.array([0.229, 0.224, 0.225], dtype=jnp.float32)

    batch = 2
    num_classes = 128
    c, h, wd = input_size
    d = c * h * wd                            # 3*16*16 = 768

    # Standard image input: [0,1], RGB, NCHW.
    x = jax.random.uniform(k_x, (batch, c, h, wd), dtype=jnp.float32)

    # Deterministic synthetic backbone parameters (linear head).
    w_cls = (jax.random.normal(k_w, (d, num_classes), dtype=jnp.float32)
             * (1.0 / jnp.sqrt(d)))
    b_cls = jax.random.normal(k_b, (num_classes,), dtype=jnp.float32) * 0.01

    ok = True
    for space in ("RGB", "BGR"):
        out = standard_forward(x, mean, std, input_range, w_cls, b_cls,
                               input_space=space)
        out = jax.block_until_ready(out)
        ref = standard_forward_ref(x, mean, std, input_range, w_cls, b_cls,
                                   input_space=space)
        assert out.shape == (batch, num_classes)
        err = float(jnp.max(jnp.abs(out - ref)))
        ok = ok and bool(jnp.allclose(out, ref, atol=1e-4, rtol=1e-4)), err

    if ok:
        print("KERNEL_OK")
</pallas_src>

<mosaic_0001>
module attributes {stable_mosaic.version = 11 : i64} {
  func.func @_fused_linear_kernel(%arg0: i32, %arg1: memref<8x768xf32, #tpu.memory_space<vmem>>, %arg2: memref<768x128xf32, #tpu.memory_space<vmem>>, %arg3: memref<1x128xf32, #tpu.memory_space<vmem>>, %arg4: memref<8x128xf32, #tpu.memory_space<vmem>>) attributes {dimension_semantics = [#tpu.dimension_semantics<arbitrary>], iteration_bounds = array<i64: 1>, scalar_prefetch = 0 : i64, scratch_operands = 0 : i64, tpu.core_type = #tpu.core_type<tc>, window_params = [{transform_indices = @transform_0, window_bounds = array<i64: 8, 768>}, {transform_indices = @transform_1, window_bounds = array<i64: 768, 128>}, {pipeline_mode = #tpu.pipeline_mode<synchronous>, transform_indices = @transform_2, window_bounds = array<i64: 1, 128>}, {pipeline_mode = #tpu.pipeline_mode<synchronous>, transform_indices = @transform_3, window_bounds = array<i64: 8, 128>}]} {
    %c0_i32 = arith.constant 0 : i32
    %0 = arith.cmpi eq, %arg0, %c0_i32 : i32
    %1 = arith.extui %0 : i1 to i32
    %c0_i32_0 = arith.constant 0 : i32
    %2 = arith.cmpi ne, %1, %c0_i32_0 : i32
    scf.if %2 {
      %c0_8 = arith.constant 0 : index
      %c0_9 = arith.constant 0 : index
      %9 = vector.load %arg3[%c0_8, %c0_9] : memref<1x128xf32, #tpu.memory_space<vmem>>, vector<1x128xf32>
      %10 = vector.shape_cast %9 : vector<1x128xf32> to vector<1x128xf32>
      %11 = vector.broadcast %10 : vector<1x128xf32> to vector<8x128xf32>
      %c0_10 = arith.constant 0 : index
      %c0_11 = arith.constant 0 : index
      %12 = vector.load %arg4[%c0_10, %c0_11] : memref<8x128xf32, #tpu.memory_space<vmem>>, vector<8x128xf32>
      tpu.vector_store %arg4[%c0_10, %c0_11], %11 {strides = array<i32>} : memref<8x128xf32, #tpu.memory_space<vmem>>, vector<8x128xf32>,
    } else {
    }
    %c0 = arith.constant 0 : index
    %c0_1 = arith.constant 0 : index
    %3 = vector.load %arg4[%c0, %c0_1] : memref<8x128xf32, #tpu.memory_space<vmem>>, vector<8x128xf32>
    %c0_2 = arith.constant 0 : index
    %c0_3 = arith.constant 0 : index
    %4 = vector.load %arg1[%c0_2, %c0_3] : memref<8x768xf32, #tpu.memory_space<vmem>>, vector<8x768xf32>
    %c0_4 = arith.constant 0 : index
    %c0_5 = arith.constant 0 : index
    %5 = vector.load %arg2[%c0_4, %c0_5] : memref<768x128xf32, #tpu.memory_space<vmem>>, vector<768x128xf32>
    %cst = arith.constant dense<0.000000e+00> : vector<8x128xf32>
    %6 = tpu.matmul %4, %5, %cst {dimension_numbers = #tpu.dot_dimension_numbers<[1], [0], [0], [1], [0, 0, 1, 1], [], []>} : vector<8x768xf32>, vector<768x128xf32>, vector<8x128xf32> -> vector<8x128xf32>
    %7 = arith.addf %3, %6 : vector<8x128xf32>
    %c0_6 = arith.constant 0 : index
    %c0_7 = arith.constant 0 : index
    %8 = vector.load %arg4[%c0_6, %c0_7] : memref<8x128xf32, #tpu.memory_space<vmem>>, vector<8x128xf32>
    tpu.vector_store %arg4[%c0_6, %c0_7], %7 {strides = array<i32>} : memref<8x128xf32, #tpu.memory_space<vmem>>, vector<8x128xf32>,
    return
  }
  func.func @transform_0(%arg0: i32) -> (i32, i32) {
    %c0_i32 = arith.constant 0 : i32
    %c0_i32_0 = arith.constant 0 : i32
    return %c0_i32, %arg0 : i32, i32
  }
  func.func @transform_1(%arg0: i32) -> (i32, i32) {
    %c0_i32 = arith.constant 0 : i32
    %c0_i32_0 = arith.constant 0 : i32
    return %arg0, %c0_i32 : i32, i32
  }
  func.func @transform_2(%arg0: i32) -> (i32, i32) {
    %c0_i32 = arith.constant 0 : i32
    %c0_i32_0 = arith.constant 0 : i32
    %c0_i32_1 = arith.constant 0 : i32
    return %c0_i32, %c0_i32_0 : i32, i32
  }
  func.func @transform_3(%arg0: i32) -> (i32, i32) {
    %c0_i32 = arith.constant 0 : i32
    %c0_i32_0 = arith.constant 0 : i32
    %c0_i32_1 = arith.constant 0 : i32
    return %c0_i32, %c0_i32_0 : i32, i32
  }
}

</mosaic_0001>

<llo_original>
// kernel: mul.5
$region0: #{mul.5}
  %s0 = inlined_call_operand.vmem [shape: f32[3,256], index: 0, kind: input, shape index: {}]
  %s1 = inlined_call_operand.vmem [shape: f32[768], index: 1, kind: output, shape index: {}]
  $region1: #{mul.5} parent=0
    #allocation0 [shape = 'u8[8192]{0}', space=vmem, size = 0x2000, scoped, tag = 'scoped mem for input reshape']
    %s3 = sshllo.u32 0, 4
    %s4 = scalar_lea.vmem %s0, 4
    %v5 = vld [vmem:[%s4] sm:%s3]
    %s6 = scalar_lea.vmem [#allocation0], 8
    %7 = vst [vmem:[%s6] sm:%s3] %v5
    %v8 = vld [vmem:[%s0] sm:%s3]
    %9 = vst [vmem:[#allocation0] sm:%s3] %v8
    %v10 = vld [vmem:[#allocation0] sm:$0x7]
    %11 = vst [vmem:[%s1] ss:$2 sm:$0x7] %v10
    %s12 = scalar_lea.vmem [#allocation0], 8
    %v13 = vld [vmem:[%s12] sm:$0x7]
    %s14 = scalar_lea.vmem %s1, 1
    %15 = vst [vmem:[%s14] ss:$2 sm:$0x7] %v13

// kernel: standard_forward.1
$region0: #{standard_forward.1}
  #allocation0 [shape = 'u32[]', space=smem, size = 0x4, offset = 0x4, fixed_abs, tag = 'smem constant byte address 0x4 - core index']
  #allocation1 [shape = 'u32[144,128]{1,0:T(1,128)}', space=vmem, size = 0x12000, scoped, tag = 'internal scratch']
  %s0 = inlined_call_operand.vmem [shape: f32[8,768], index: 0, kind: input, shape index: {}]
  %s1 = inlined_call_operand.vmem [shape: f32[768,128], index: 1, kind: input, shape index: {}]
  %s2 = inlined_call_operand.vmem [shape: f32[1,128], index: 2, kind: input, shape index: {}]
  %s3 = inlined_call_operand.vmem [shape: f32[8,128], index: 3, kind: output, shape index: {}]
  %s4 = sld [smem:[#allocation0]]
  $region26: #{standard_forward.1} parent=0
    _
  %s6 = ssub.s32 1, %s4
  %s7 = scalar_select 0, %s6, %s4
  // Predicated region
  $region2: #{standard_forward.1} parent=0 // pred_check
    _
  $region3: #{standard_forward.1} parent=0 // pred_check_branch
    %9 = sbr.rel (0) target = $region5
  $region4: #{standard_forward.1} parent=0 // pred_region
    _
  $region5: #{standard_forward.1} parent=0 // pred_fallthru
    _
  // Predicated region
  $region6: #{standard_forward.1} parent=0 // pred_check
    _
  $region7: #{standard_forward.1} parent=0 // pred_check_branch
    %11 = sbr.rel (0) target = $region9
  $region8: #{standard_forward.1} parent=0 // pred_region
    _
  $region9: #{standard_forward.1} parent=0 // pred_fallthru
    _
  // Predicated region
  $region10: #{standard_forward.1} parent=0 // pred_check
    _
  $region11: #{standard_forward.1} parent=0 // pred_check_branch
    %13 = sbr.rel (0) target = $region13
  $region12: #{standard_forward.1} parent=0 // pred_region
    _
  $region13: #{standard_forward.1} parent=0 // pred_fallthru
    _
  %p14 = scmp.eq.s32.totalorder 0, 0
  // Predicated region
  $region14: #{standard_forward.1} parent=0 // pred_check
    %p15 = pneg %p14
  $region15: #{standard_forward.1} parent=0 // pred_check_branch
    %17 = sbr.rel (%p15) target = $region17
  $region16: #{standard_forward.1} parent=0 // pred_region
    %v18 = vld [vmem:[%s2] sm:$0x1]
    %v20 = vlaneseq
    %v21 = vshrl.u32 %v20, 7
    %v22 = vsub.s32 0, %v21
    %v23 = vrot.slane %v18, %v22
    %25 = vst [vmem:[%s3] sm:$0xff] %v23
  $region17: #{standard_forward.1} parent=0 // pred_fallthru
    _
  %v26 = vld [vmem:[%s3] sm:$0xff]
  %v27 = vld [vmem:[%s0] sm:$0xff]
  %v28 = vld [vmem:[%s0 + $0x8] sm:$0xff]
  %v29 = vld [vmem:[%s0 + $0x10] sm:$0xff]
  %v30 = vld [vmem:[%s0 + $0x18] sm:$0xff]
  %v31 = vld [vmem:[%s0 + $0x20] sm:$0xff]
  %v32 = vld [vmem:[%s0 + $0x28] sm:$0xff]
  %v33 = vld [vmem:[%s1] sm:$0xff]
  %v34 = vld [vmem:[%s1 + $0x8] sm:$0xff]
  %v35 = vld [vmem:[%s1 + $0x10] sm:$0xff]
  %v36 = vld [vmem:[%s1 + $0x18] sm:$0xff]
  %v37 = vld [vmem:[%s1 + $0x20] sm:$0xff]
  %v38 = vld [vmem:[%s1 + $0x28] sm:$0xff]
  %v39 = vld [vmem:[%s1 + $0x30] sm:$0xff]
  %v40 = vld [vmem:[%s1 + $0x38] sm:$0xff]
  %v41 = vld [vmem:[%s1 + $0x40] sm:$0xff]
  %v42 = vld [vmem:[%s1 + $0x48] sm:$0xff]
  %v43 = vld [vmem:[%s1 + $0x50] sm:$0xff]
  %v44 = vld [vmem:[%s1 + $0x58] sm:$0xff]
  %v45 = vld [vmem:[%s1 + $0x60] sm:$0xff]
  %v46 = vld [vmem:[%s1 + $0x68] sm:$0xff]
  %v47 = vld [vmem:[%s1 + $0x70] sm:$0xff]
  %v48 = vld [vmem:[%s1 + $0x78] sm:$0xff]
  %v49 = vld [vmem:[%s1 + $0x80] sm:$0xff]
  %v50 = vld [vmem:[%s1 + $0x88] sm:$0xff]
  %v51 = vld [vmem:[%s1 + $0x90] sm:$0xff]
  %v52 = vld [vmem:[%s1 + $0x98] sm:$0xff]
  %v53 = vld [vmem:[%s1 + $0xa0] sm:$0xff]
  %v54 = vld [vmem:[%s1 + $0xa8] sm:$0xff]
  %v55 = vld [vmem:[%s1 + $0xb0] sm:$0xff]
  %v56 = vld [vmem:[%s1 + $0xb8] sm:$0xff]
  %v57 = vld [vmem:[%s1 + $0xc0] sm:$0xff]
  %v58 = vld [vmem:[%s1 + $0xc8] sm:$0xff]
  %v59 = vld [vmem:[%s1 + $0xd0] sm:$0xff]
  %v60 = vld [vmem:[%s1 + $0xd8] sm:$0xff]
  %v61 = vld [vmem:[%s1 + $0xe0] sm:$0xff]
  %v62 = vld [vmem:[%s1 + $0xe8] sm:$0xff]
  %v63 = vld [vmem:[%s1 + $0xf0] sm:$0xff]
  %v64 = vld [vmem:[%s1 + $0xf8] sm:$0xff]
  %v65 = vld [vmem:[%s1 + $0x100] sm:$0xff]
  %v66 = vld [vmem:[%s1 + $0x108] sm:$0xff]
  %v67 = vld [vmem:[%s1 + $0x110] sm:$0xff]
  %v68 = vld [vmem:[%s1 + $0x118] sm:$0xff]
  %v69 = vld [vmem:[%s1 + $0x120] sm:$0xff]
  %v70 = vld [vmem:[%s1 + $0x128] sm:$0xff]
  %v71 = vld [vmem:[%s1 + $0x130] sm:$0xff]
  %v72 = vld [vmem:[%s1 + $0x138] sm:$0xff]
  %v73 = vld [vmem:[%s1 + $0x140] sm:$0xff]
  %v74 = vld [vmem:[%s1 + $0x148] sm:$0xff]
  %v75 = vld [vmem:[%s1 + $0x150] sm:$0xff]
  %v76 = vld [vmem:[%s1 + $0x158] sm:$0xff]
  %v77 = vld [vmem:[%s1 + $0x160] sm:$0xff]
  %v78 = vld [vmem:[%s1 + $0x168] sm:$0xff]
  %v79 = vld [vmem:[%s1 + $0x170] sm:$0xff]
  %v80 = vld [vmem:[%s1 + $0x178] sm:$0xff]
  %v81 = vld [vmem:[%s1 + $0x180] sm:$0xff]
  %v82 = vld [vmem:[%s1 + $0x188] sm:$0xff]
  %v83 = vld [vmem:[%s1 + $0x190] sm:$0xff]
  %v84 = vld [vmem:[%s1 + $0x198] sm:$0xff]
  %v85 = vld [vmem:[%s1 + $0x1a0] sm:$0xff]
  %v86 = vld [vmem:[%s1 + $0x1a8] sm:$0xff]
  %v87 = vld [vmem:[%s1 + $0x1b0] sm:$0xff]
  %v88 = vld [vmem:[%s1 + $0x1b8] sm:$0xff]
  %v89 = vld [vmem:[%s1 + $0x1c0] sm:$0xff]
  %v90 = vld [vmem:[%s1 + $0x1c8] sm:$0xff]
  %v91 = vld [vmem:[%s1 + $0x1d0] sm:$0xff]
  %v92 = vld [vmem:[%s1 + $0x1d8] sm:$0xff]
  %v93 = vld [vmem:[%s1 + $0x1e0] sm:$0xff]
  %v94 = vld [vmem:[%s1 + $0x1e8] sm:$0xff]
  %v95 = vld [vmem:[%s1 + $0x1f0] sm:$0xff]
  %v96 = vld [vmem:[%s1 + $0x1f8] sm:$0xff]
  %v97 = vld [vmem:[%s1 + $0x200] sm:$0xff]
  %v98 = vld [vmem:[%s1 + $0x208] sm:$0xff]
  %v99 = vld [vmem:[%s1 + $0x210] sm:$0xff]
  %v100 = vld [vmem:[%s1 + $0x218] sm:$0xff]
  %v101 = vld [vmem:[%s1 + $0x220] sm:$0xff]
  %v102 = vld [vmem:[%s1 + $0x228] sm:$0xff]
  %v103 = vld [vmem:[%s1 + $0x230] sm:$0xff]
  %v104 = vld [vmem:[%s1 + $0x238] sm:$0xff]
  %v105 = vld [vmem:[%s1 + $0x240] sm:$0xff]
  %v106 = vld [vmem:[%s1 + $0x248] sm:$0xff]
  %v107 = vld [vmem:[%s1 + $0x250] sm:$0xff]
  %v108 = vld [vmem:[%s1 + $0x258] sm:$0xff]
  %v109 = vld [vmem:[%s1 + $0x260] sm:$0xff]
  %v110 = vld [vmem:[%s1 + $0x268] sm:$0xff]
  %v111 = vld [vmem:[%s1 + $0x270] sm:$0xff]
  %v112 = vld [vmem:[%s1 + $0x278] sm:$0xff]
  %v113 = vld [vmem:[%s1 + $0x280] sm:$0xff]
  %v114 = vld [vmem:[%s1 + $0x288] sm:$0xff]
  %v115 = vld [vmem:[%s1 + $0x290] sm:$0xff]
  %v116 = vld [vmem:[%s1 + $0x298] sm:$0xff]
  %v117 = vld [vmem:[%s1 + $0x2a0] sm:$0xff]
  %v118 = vld [vmem:[%s1 + $0x2a8] sm:$0xff]
  %v119 = vld [vmem:[%s1 + $0x2b0] sm:$0xff]
  %v120 = vld [vmem:[%s1 + $0x2b8] sm:$0xff]
  %v121 = vld [vmem:[%s1 + $0x2c0] sm:$0xff]
  %v122 = vld [vmem:[%s1 + $0x2c8] sm:$0xff]
  %v123 = vld [vmem:[%s1 + $0x2d0] sm:$0xff]
  %v124 = vld [vmem:[%s1 + $0x2d8] sm:$0xff]
  %v125 = vld [vmem:[%s1 + $0x2e0] sm:$0xff]
  %v126 = vld [vmem:[%s1 + $0x2e8] sm:$0xff]
  %v127 = vld [vmem:[%s1 + $0x2f0] sm:$0xff]
  %v128 = vld [vmem:[%s1 + $0x2f8] sm:$0xff]
  %129 = vmatprep.subr.mxu0 0.0
  %130 = vmatpush1.msra.mxu0 %v33
  %131 = vmatprep.subr.mxu0 0.0
  %132 = vmatpush1.msra.mxu0 %v34
  %133 = vmatprep.subr.mxu0 0.0
  %134 = vmatpush1.msra.mxu0 %v35
  %135 = vmatprep.subr.mxu0 0.0
  %136 = vmatpush1.msra.mxu0 %v36
  %137 = vmatprep.subr.mxu0 0.0
  %138 = vmatpush1.msra.mxu0 %v37
  %139 = vmatprep.subr.mxu0 0.0
  %140 = vmatpush1.msra.mxu0 %v38
  %141 = vmatprep.subr.mxu0 0.0
  %142 = vmatpush1.msra.mxu0 %v39
  %143 = vmatprep.subr.mxu0 0.0
  %144 = vmatpush1.msra.mxu0 %v40
  %145 = vmatprep.subr.mxu0 0.0
  %146 = vmatpush1.msra.mxu0 %v41
  %147 = vmatprep.subr.mxu0 0.0
  %148 = vmatpush1.msra.mxu0 %v42
  %149 = vmatprep.subr.mxu0 0.0
  %150 = vmatpush1.msra.mxu0 %v43
  %151 = vmatprep.subr.mxu0 0.0
  %152 = vmatpush1.msra.mxu0 %v44
  %153 = vmatprep.subr.mxu0 0.0
  %154 = vmatpush1.msra.mxu0 %v45
  %155 = vmatprep.subr.mxu0 0.0
  %156 = vmatpush1.msra.mxu0 %v46
  %157 = vmatprep.subr.mxu0 0.0
  %158 = vmatpush1.msra.mxu0 %v47
  %159 = vmatprep.subr.mxu0 0.0
  %160 = vmatpush1.msra.mxu0 %v48
  %161 = vmatprep.subr.mxu0 0.0
  %162 = vmatpush1.msra.mxu0 %v49
  %163 = vmatprep.subr.mxu0 0.0
  %164 = vmatpush1.msra.mxu0 %v50
  %165 = vmatprep.subr.mxu0 0.0
  %166 = vmatpush1.msra.mxu0 %v51
  %167 = vmatprep.subr.mxu0 0.0
  %168 = vmatpush1.msra.mxu0 %v52
  %169 = vmatprep.subr.mxu0 0.0
  %170 = vmatpush1.msra.mxu0 %v53
  %171 = vmatprep.subr.mxu0 0.0
  %172 = vmatpush1.msra.mxu0 %v54
  %173 = vmatprep.subr.mxu0 0.0
  %174 = vmatpush1.msra.mxu0 %v55
  %175 = vmatprep.subr.mxu0 0.0
  %176 = vmatpush1.msra.mxu0 %v56
  %177 = vmatprep.subr.mxu0 0.0
  %178 = vmatpush1.msra.mxu0 %v57
  %179 = vmatprep.subr.mxu0 0.0
  %180 = vmatpush1.msra.mxu0 %v58
  %181 = vmatprep.subr.mxu0 0.0
  %182 = vmatpush1.msra.mxu0 %v59
  %183 = vmatprep.subr.mxu0 0.0
  %184 = vmatpush1.msra.mxu0 %v60
  %185 = vmatprep.subr.mxu0 0.0
  %186 = vmatpush1.msra.mxu0 %v61
  %187 = vmatprep.subr.mxu0 0.0
  %188 = vmatpush1.msra.mxu0 %v62
  %189 = vmatprep.subr.mxu0 0.0
  %190 = vmatpush1.msra.mxu0 %v63
  %191 = vmatprep.subr.mxu0 0.0
  %192 = vmatpush1.msra.mxu0 %v64
  %193 = vmatprep.mubr.f32.mxu0 %v28
  %194 = vmatmul.mubr.f32.gmra.mrb[0].mxu0 %v27
  %v195 = vpop.f32.mrb[0].mxu0
  %v196 = vadd.f32 0.0, %v195
  %v197 = vpop.f32.mrb[0].mxu0
  %198 = vdwg.mxu0
  %199 = vmatprep.subr.mxu0 0.0
  %200 = vmatpush1.msra.mxu0 %v65
  %201 = vmatprep.subr.mxu0 0.0
  %202 = vmatpush1.msra.mxu0 %v66
  %203 = vmatprep.subr.mxu0 0.0
  %204 = vmatpush1.msra.mxu0 %v67
  %205 = vmatprep.subr.mxu0 0.0
  %206 = vmatpush1.msra.mxu0 %v68
  %207 = vmatprep.subr.mxu0 0.0
  %208 = vmatpush1.msra.mxu0 %v69
  %209 = vmatprep.subr.mxu0 0.0
  %210 = vmatpush1.msra.mxu0 %v70
  %211 = vmatprep.subr.mxu0 0.0
  %212 = vmatpush1.msra.mxu0 %v71
  %213 = vmatprep.subr.mxu0 0.0
  %214 = vmatpush1.msra.mxu0 %v72
  %215 = vmatprep.subr.mxu0 0.0
  %216 = vmatpush1.msra.mxu0 %v73
  %217 = vmatprep.subr.mxu0 0.0
  %218 = vmatpush1.msra.mxu0 %v74
  %219 = vmatprep.subr.mxu0 0.0
  %220 = vmatpush1.msra.mxu0 %v75
  %221 = vmatprep.subr.mxu0 0.0
  %222 = vmatpush1.msra.mxu0 %v76
  %223 = vmatprep.subr.mxu0 0.0
  %224 = vmatpush1.msra.mxu0 %v77
  %225 = vmatprep.subr.mxu0 0.0
  %226 = vmatpush1.msra.mxu0 %v78
  %227 = vmatprep.subr.mxu0 0.0
  %228 = vmatpush1.msra.mxu0 %v79
  %229 = vmatprep.subr.mxu0 0.0
  %230 = vmatpush1.msra.mxu0 %v80
  %231 = vmatprep.subr.mxu0 0.0
  %232 = vmatpush1.msra.mxu0 %v81
  %233 = vmatprep.subr.mxu0 0.0
  %234 = vmatpush1.msra.mxu0 %v82
  %235 = vmatprep.subr.mxu0 0.0
  %236 = vmatpush1.msra.mxu0 %v83
  %237 = vmatprep.subr.mxu0 0.0
  %238 = vmatpush1.msra.mxu0 %v84
  %239 = vmatprep.subr.mxu0 0.0
  %240 = vmatpush1.msra.mxu0 %v85
  %241 = vmatprep.subr.mxu0 0.0
  %242 = vmatpush1.msra.mxu0 %v86
  %243 = vmatprep.subr.mxu0 0.0
  %244 = vmatpush1.msra.mxu0 %v87
  %245 = vmatprep.subr.mxu0 0.0
  %246 = vmatpush1.msra.mxu0 %v88
  %247 = vmatprep.subr.mxu0 0.0
  %248 = vmatpush1.msra.mxu0 %v89
  %249 = vmatprep.subr.mxu0 0.0
  %250 = vmatpush1.msra.mxu0 %v90
  %251 = vmatprep.subr.mxu0 0.0
  %252 = vmatpush1.msra.mxu0 %v91
  %253 = vmatprep.subr.mxu0 0.0
  %254 = vmatpush1.msra.mxu0 %v92
  %255 = vmatprep.subr.mxu0 0.0
  %256 = vmatpush1.msra.mxu0 %v93
  %257 = vmatprep.subr.mxu0 0.0
  %258 = vmatpush1.msra.mxu0 %v94
  %259 = vmatprep.subr.mxu0 0.0
  %260 = vmatpush1.msra.mxu0 %v95
  %261 = vmatprep.subr.mxu0 0.0
  %262 = vmatpush1.msra.mxu0 %v96
  %263 = vmatprep.mubr.f32.mxu0 %v30
  %264 = vmatmul.mubr.f32.gmra.mrb[0].mxu0 %v29
  %v265 = vpop.f32.mrb[0].mxu0
  %v266 = vadd.f32 %v196, %v265
  %v267 = vpop.f32.mrb[0].mxu0
  %268 = vdwg.mxu0
  %269 = vmatprep.subr.mxu0 0.0
  %270 = vmatpush1.msra.mxu0 %v97
  %271 = vmatprep.subr.mxu0 0.0
  %272 = vmatpush1.msra.mxu0 %v98
  %273 = vmatprep.subr.mxu0 0.0
  %274 = vmatpush1.msra.mxu0 %v99
  %275 = vmatprep.subr.mxu0 0.0
  %276 = vmatpush1.msra.mxu0 %v100
  %277 = vmatprep.subr.mxu0 0.0
  %278 = vmatpush1.msra.mxu0 %v101
  %279 = vmatprep.subr.mxu0 0.0
  %280 = vmatpush1.msra.mxu0 %v102
  %281 = vmatprep.subr.mxu0 0.0
  %282 = vmatpush1.msra.mxu0 %v103
  %283 = vmatprep.subr.mxu0 0.0
  %284 = vmatpush1.msra.mxu0 %v104
  %285 = vmatprep.subr.mxu0 0.0
  %286 = vmatpush1.msra.mxu0 %v105
  %287 = vmatprep.subr.mxu0 0.0
  %288 = vmatpush1.msra.mxu0 %v106
  %289 = vmatprep.subr.mxu0 0.0
  %290 = vmatpush1.msra.mxu0 %v107
  %291 = vmatprep.subr.mxu0 0.0
  %292 = vmatpush1.msra.mxu0 %v108
  %293 = vmatprep.subr.mxu0 0.0
  %294 = vmatpush1.msra.mxu0 %v109
  %295 = vmatprep.subr.mxu0 0.0
  %296 = vmatpush1.msra.mxu0 %v110
  %297 = vmatprep.subr.mxu0 0.0
  %298 = vmatpush1.msra.mxu0 %v111
  %299 = vmatprep.subr.mxu0 0.0
  %300 = vmatpush1.msra.mxu0 %v112
  %301 = vmatprep.subr.mxu0 0.0
  %302 = vmatpush1.msra.mxu0 %v113
  %303 = vmatprep.subr.mxu0 0.0
  %304 = vmatpush1.msra.mxu0 %v114
  %305 = vmatprep.subr.mxu0 0.0
  %306 = vmatpush1.msra.mxu0 %v115
  %307 = vmatprep.subr.mxu0 0.0
  %308 = vmatpush1.msra.mxu0 %v116
  %309 = vmatprep.subr.mxu0 0.0
  %310 = vmatpush1.msra.mxu0 %v117
  %311 = vmatprep.subr.mxu0 0.0
  %312 = vmatpush1.msra.mxu0 %v118
  %313 = vmatprep.subr.mxu0 0.0
  %314 = vmatpush1.msra.mxu0 %v119
  %315 = vmatprep.subr.mxu0 0.0
  %316 = vmatpush1.msra.mxu0 %v120
  %317 = vmatprep.subr.mxu0 0.0
  %318 = vmatpush1.msra.mxu0 %v121
  %319 = vmatprep.subr.mxu0 0.0
  %320 = vmatpush1.msra.mxu0 %v122
  %321 = vmatprep.subr.mxu0 0.0
  %322 = vmatpush1.msra.mxu0 %v123
  %323 = vmatprep.subr.mxu0 0.0
  %324 = vmatpush1.msra.mxu0 %v124
  %325 = vmatprep.subr.mxu0 0.0
  %326 = vmatpush1.msra.mxu0 %v125
  %327 = vmatprep.subr.mxu0 0.0
  %328 = vmatpush1.msra.mxu0 %v126
  %329 = vmatprep.subr.mxu0 0.0
  %330 = vmatpush1.msra.mxu0 %v127
  %331 = vmatprep.subr.mxu0 0.0
  %332 = vmatpush1.msra.mxu0 %v128
  %333 = vmatprep.mubr.f32.mxu0 %v32
  %334 = vmatmul.mubr.f32.gmra.mrb[0].mxu0 %v31
  %v335 = vpop.f32.mrb[0].mxu0
  %v336 = vadd.f32 %v266, %v335
  %v337 = vpop.f32.mrb[0].mxu0
  %338 = vdwg.mxu0
  %v339 = vadd.f32 %v26, %v336
  %340 = vst [vmem:[%s3] sm:$0xff] %v339
  // Predicated region
  $region18: #{standard_forward.1} parent=0 // pred_check
    _
  $region19: #{standard_forward.1} parent=0 // pred_check_branch
    %342 = sbr.rel (0) target = $region21
  $region20: #{standard_forward.1} parent=0 // pred_region
    _
  $region21: #{standard_forward.1} parent=0 // pred_fallthru
    _
  // Predicated region
  $region22: #{standard_forward.1} parent=0 // pred_check
    _
  $region23: #{standard_forward.1} parent=0 // pred_check_branch
    %344 = sbr.rel (0) target = $region25
  $region24: #{standard_forward.1} parent=0 // pred_region
    _
  $region25: #{standard_forward.1} parent=0 // pred_fallthru
    _

</llo_original>
